<compile_context>
chip_gen: v7x
topology: tpu7x:2x2x1
jax: 0.10.0
libtpu: 0.0.40
codegen_flags: <defaults>
</compile_context>

<pallas_src>
import jax
import jax.numpy as jnp
from jax.experimental import pallas as pl
from jax.experimental.pallas import tpu as pltpu


# ---------------------------------------------------------------------------
# Kernel: one dense (b_tile, K) @ (K, N) MXU pass + bias add.
# ---------------------------------------------------------------------------
def _diag_linear_kernel(x_ref, w_ref, b_ref, o_ref):
    # x_ref: (b_tile, K)   w_ref: (K, N)   b_ref: (1, N) f32   o_ref: (b_tile, N)
    y = jnp.dot(x_ref[...], w_ref[...], preferred_element_type=jnp.float32)
    o_ref[...] = (y + b_ref[...]).astype(o_ref.dtype)


# ---------------------------------------------------------------------------
# Tiling heuristics
# ---------------------------------------------------------------------------
def _mxu_width():
    """Native MXU tile width: 128 on v2-v5e, 256 on v6e/v7x."""
    try:
        kind = jax.devices()[0].device_kind.lower()
    except Exception:
        return 256
    for tag in ("v2", "v3", "v4", "v5"):
        if tag in kind:
            return 128
    return 256


def _pick_group(n_copies, ip_dim, op_dim, cap):
    """Number of copies packed into one block-diagonal tile.

    Returns 1 (no packing) when each copy already fills a lane-dense / MXU
    sized block.  Otherwise: largest divisor G of n_copies with 128-aligned
    G*ip and G*op, capped at the MXU width; falls back to the smallest
    lane-dense divisor, then to n_copies (full feature axis: always legal)."""
    if ip_dim % 128 == 0 and op_dim % 128 == 0:
        return 1
    best = None
    for g in range(1, n_copies + 1):
        if n_copies % g:
            continue
        if (g * ip_dim) % 128 == 0 and (g * op_dim) % 128 == 0 \
                and g * max(ip_dim, op_dim) <= cap:
            best = g
    if best is not None:
        return best
    for g in range(1, n_copies + 1):
        if n_copies % g == 0 and (g * ip_dim) % 128 == 0 and (g * op_dim) % 128 == 0:
            return g
    return n_copies


def _pick_b_tile(B, K, N, itemsize):
    """Batch tile (<=1024 rows, VMEM-budgeted) and the padded batch size.
    Never falls back to a huge full-extent batch block."""
    budget = 16 * 1024 * 1024  # double-buffered x+o tile budget
    max_rows = max(8, budget // max(1, 2 * (K + N) * itemsize))
    max_tile = min(1024, (max_rows // 8) * 8)
    max_tile = max(8, max_tile)
    if B <= max_tile:
        return B, B                       # block == full dim: always legal
    for t in (1024, 512, 256, 128, 64, 32, 16, 8):
        if t <= max_tile and B % t == 0:
            return t, B                   # clean divisor, no padding
    t = min(512, max_tile)
    padded = ((B + t - 1) // t) * t       # pad instead of a giant block
    return t, padded


# ---------------------------------------------------------------------------
# One-time weight preprocessing (hoisted out of the per-call hot path).
# ---------------------------------------------------------------------------
def prepare_diagonal_linear(weights, biases=None, *, compute_dtype=None,
                            mxu_cap=None):
    """weights: (n_copies, op_dim, ip_dim); biases: (n_copies, op_dim) or None.
    Returns a params dict to be reused across forward calls."""
    n_copies, op_dim, ip_dim = weights.shape
    if biases is None:
        biases = jnp.zeros((n_copies, op_dim), jnp.float32)
    cap = _mxu_width() if mxu_cap is None else mxu_cap
    G = _pick_group(n_copies, ip_dim, op_dim, cap)
    n_groups = n_copies // G
    K, N = G * ip_dim, G * op_dim

    w_dtype = compute_dtype if compute_dtype is not None else weights.dtype
    # transpose each copy to (ip, op) so there is no in-kernel transpose
    w_t = jnp.transpose(weights, (0, 2, 1)).reshape(n_groups, G, ip_dim, op_dim)
    if G == 1:
        w_blocks = w_t.reshape(n_groups, K, N)
    else:
        # scatter G copies onto the diagonal of a (K, N) tile per group
        eye = jnp.eye(G, dtype=weights.dtype)
        w_blocks = jnp.einsum('gh,ngio->ngiho', eye, w_t).reshape(n_groups, K, N)
    w_blocks = w_blocks.astype(w_dtype)

    b_blocks = biases.astype(jnp.float32).reshape(n_groups, 1, N)

    meta = dict(n_copies=n_copies, ip_dim=ip_dim, op_dim=op_dim,
                G=G, n_groups=n_groups, K=K, N=N,
                compute_dtype=compute_dtype)
    return dict(w=w_blocks, b=b_blocks, meta=meta)


# ---------------------------------------------------------------------------
# Forward
# ---------------------------------------------------------------------------
def apply_diagonal_linear(params, x):
    """x: (B, n_copies*ip_dim) -> (B, n_copies*op_dim)."""
    w_blocks, b_blocks, meta = params["w"], params["b"], params["meta"]
    n_groups, K, N = meta["n_groups"], meta["K"], meta["N"]
    assert x.shape[1] == n_groups * K

    out_dtype = x.dtype
    compute_dtype = meta["compute_dtype"]
    x_k = x.astype(compute_dtype) if compute_dtype is not None else x

    B = x.shape[0]
    x_item = jnp.dtype(x_k.dtype).itemsize
    o_item = jnp.dtype(out_dtype).itemsize
    w_item = jnp.dtype(w_blocks.dtype).itemsize
    b_tile, padded_B = _pick_b_tile(B, K, N, max(x_item, o_item))
    if padded_B != B:
        x_k = jnp.pad(x_k, ((0, padded_B - B), (0, 0)))
    n_b = padded_B // b_tile

    # VMEM budget (double-buffered x/o tiles + weight/bias block) with margin.
    need = 2 * (b_tile * K * x_item + b_tile * N * o_item
                + K * N * w_item + N * 4)
    vmem_limit = int(min(max(2 * need + (4 << 20), 16 << 20), 64 << 20))

    cost = pl.CostEstimate(
        flops=2 * padded_B * n_groups * K * N,
        transcendentals=0,
        bytes_accessed=int(padded_B * n_groups * K * x_item
                           + n_groups * K * N * w_item
                           + n_groups * N * 4
                           + padded_B * n_groups * N * o_item))

    out = pl.pallas_call(
        _diag_linear_kernel,
        out_shape=jax.ShapeDtypeStruct((padded_B, n_groups * N), out_dtype),
        grid_spec=pltpu.PrefetchScalarGridSpec(
            num_scalar_prefetch=0,
            # Group axis OUTER, batch axis INNER: weight/bias block indices are
            # constant across consecutive batch steps -> fetched once per group.
            grid=(n_groups, n_b),
            in_specs=[
                pl.BlockSpec((b_tile, K), lambda j, b: (b, j)),
                pl.BlockSpec((pl.Squeezed(), K, N), lambda j, b: (j, 0, 0)),
                pl.BlockSpec((pl.Squeezed(), 1, N), lambda j, b: (j, 0, 0)),
            ],
            out_specs=pl.BlockSpec((b_tile, N), lambda j, b: (b, j)),
        ),
        compiler_params=pltpu.CompilerParams(
            dimension_semantics=("parallel", "parallel"),
            vmem_limit_bytes=vmem_limit),
        cost_estimate=cost,
    )(x_k, w_blocks, b_blocks)

    return out[:B] if padded_B != B else out


def diagonal_linear(x, weights, biases, **kwargs):
    """Convenience one-shot wrapper (prep + apply). For repeated forward calls
    call prepare_diagonal_linear() once and reuse the params."""
    return apply_diagonal_linear(prepare_diagonal_linear(weights, biases, **kwargs), x)


# ---------------------------------------------------------------------------
# Param init (matches the module: xavier_uniform for 2-D, constant 0 for 1-D)
# ---------------------------------------------------------------------------
def init_params(key, n_copies, ip_dim, op_dim):
    bound = (6.0 / (ip_dim + op_dim)) ** 0.5
    keys = jax.random.split(key, n_copies)
    weights = jnp.stack([
        jax.random.uniform(k, (op_dim, ip_dim), jnp.float32, -bound, bound)
        for k in keys
    ])                                              # (n_copies, op_dim, ip_dim)
    biases = jnp.zeros((n_copies, op_dim), jnp.float32)
    return weights, biases


# ---------------------------------------------------------------------------
# Pure-JAX reference: build the dense block-diagonal W1 and do F.linear.
# ---------------------------------------------------------------------------
def _reference(x, weights, biases):
    n_copies, op_dim, ip_dim = weights.shape
    W1 = jnp.zeros((n_copies * op_dim, n_copies * ip_dim), jnp.float32)
    b1 = jnp.zeros((n_copies * op_dim,), jnp.float32)
    for i in range(n_copies):
        W1 = W1.at[i * op_dim:(i + 1) * op_dim,
                   i * ip_dim:(i + 1) * ip_dim].set(weights[i])
        b1 = b1.at[i * op_dim:(i + 1) * op_dim].set(biases[i])
    return x @ W1.T + b1


if __name__ == "__main__":
    # (n_copies, ip_dim, op_dim, batch, compute_dtype, tol)
    configs = [
        (4, 32, 32, 8, None, 1e-4),        # single lane-dense packed group
        (32, 32, 32, 16, None, 1e-4),       # multiple groups: group-outer grid path
        (2, 128, 128, 8, None, 1e-4),       # packing gated off (per-copy MXU blocks)
        (4, 32, 32, 1030, None, 1e-4),      # batch-padding path (1030 -> tile 512)
        (8, 32, 32, 16, jnp.bfloat16, 2e-2),  # bf16 inputs, f32 accumulation
    ]
    for idx, (n_copies, ip_dim, op_dim, batch, cdt, tol) in enumerate(configs):
        key = jax.random.PRNGKey(0)
        k_param, k_x = jax.random.split(key)
        weights, biases = init_params(k_param, n_copies, ip_dim, op_dim)
        # give biases nonzero values so the bias path is actually checked
        biases = biases + 0.1 * jnp.arange(
            n_copies * op_dim, dtype=jnp.float32).reshape(n_copies, op_dim)
        x = jax.random.normal(k_x, (batch, n_copies * ip_dim), jnp.float32)

        params = prepare_diagonal_linear(weights, biases, compute_dtype=cdt)
        y = apply_diagonal_linear(params, x)
        y = jax.block_until_ready(y)

        y_ref = _reference(x, weights, biases)
        assert y.shape == (batch, n_copies * op_dim), f"config {idx}: bad shape {y.shape}"
        assert bool(jnp.allclose(y.astype(jnp.float32), y_ref, atol=tol, rtol=tol)), \
            f"config {idx}: max abs err {jnp.max(jnp.abs(y.astype(jnp.float32) - y_ref))}"

    print("KERNEL_OK")
</pallas_src>

<mosaic_0001>
module attributes {stable_mosaic.version = 11 : i64} {
  func.func @_diag_linear_kernel(%arg0: i32, %arg1: i32, %arg2: memref<8x128xf32, #tpu.memory_space<vmem>>, %arg3: memref<1x128x128xf32, #tpu.memory_space<vmem>>, %arg4: memref<1x1x128xf32, #tpu.memory_space<vmem>>, %arg5: memref<8x128xf32, #tpu.memory_space<vmem>>) attributes {dimension_semantics = [#tpu.dimension_semantics<parallel>, #tpu.dimension_semantics<parallel>], iteration_bounds = array<i64: 1, 1>, scalar_prefetch = 0 : i64, scratch_operands = 0 : i64, tpu.core_type = #tpu.core_type<tc>, window_params = [{transform_indices = @transform_0, window_bounds = array<i64: 8, 128>}, {transform_indices = @transform_1, window_bounds = array<i64: 1, 128, 128>}, {transform_indices = @transform_2, window_bounds = array<i64: 1, 1, 128>}, {transform_indices = @transform_3, window_bounds = array<i64: 8, 128>}]} {
    %c0 = arith.constant 0 : index
    %c0_0 = arith.constant 0 : index
    %0 = vector.load %arg2[%c0, %c0_0] : memref<8x128xf32, #tpu.memory_space<vmem>>, vector<8x128xf32>
    %c0_1 = arith.constant 0 : index
    %c0_2 = arith.constant 0 : index
    %c0_3 = arith.constant 0 : index
    %1 = vector.load %arg3[%c0_1, %c0_2, %c0_3] : memref<1x128x128xf32, #tpu.memory_space<vmem>>, vector<1x128x128xf32>
    %2 = vector.shape_cast %1 : vector<1x128x128xf32> to vector<128x128xf32>
    %cst = arith.constant dense<0.000000e+00> : vector<8x128xf32>
    %3 = tpu.matmul %0, %2, %cst {dimension_numbers = #tpu.dot_dimension_numbers<[1], [0], [0], [1], [0, 0, 1, 1], [], []>} : vector<8x128xf32>, vector<128x128xf32>, vector<8x128xf32> -> vector<8x128xf32>
    %c0_4 = arith.constant 0 : index
    %c0_5 = arith.constant 0 : index
    %c0_6 = arith.constant 0 : index
    %4 = vector.load %arg4[%c0_4, %c0_5, %c0_6] : memref<1x1x128xf32, #tpu.memory_space<vmem>>, vector<1x1x128xf32>
    %5 = vector.shape_cast %4 : vector<1x1x128xf32> to vector<1x128xf32>
    %6 = vector.broadcast %5 : vector<1x128xf32> to vector<8x128xf32>
    %7 = arith.addf %3, %6 : vector<8x128xf32>
    %c0_7 = arith.constant 0 : index
    %c0_8 = arith.constant 0 : index
    %8 = vector.load %arg5[%c0_7, %c0_8] : memref<8x128xf32, #tpu.memory_space<vmem>>, vector<8x128xf32>
    tpu.vector_store %arg5[%c0_7, %c0_8], %7 {strides = array<i32>} : memref<8x128xf32, #tpu.memory_space<vmem>>, vector<8x128xf32>,
    return
  }
  func.func @transform_0(%arg0: i32, %arg1: i32) -> (i32, i32) {
    %c0_i32 = arith.constant 0 : i32
    return %arg1, %arg0 : i32, i32
  }
  func.func @transform_1(%arg0: i32, %arg1: i32) -> (i32, i32, i32) {
    %c0_i32 = arith.constant 0 : i32
    %c0_i32_0 = arith.constant 0 : i32
    %c0_i32_1 = arith.constant 0 : i32
    return %arg0, %c0_i32, %c0_i32_0 : i32, i32, i32
  }
  func.func @transform_2(%arg0: i32, %arg1: i32) -> (i32, i32, i32) {
    %c0_i32 = arith.constant 0 : i32
    %c0_i32_0 = arith.constant 0 : i32
    %c0_i32_1 = arith.constant 0 : i32
    return %arg0, %c0_i32, %c0_i32_0 : i32, i32, i32
  }
  func.func @transform_3(%arg0: i32, %arg1: i32) -> (i32, i32) {
    %c0_i32 = arith.constant 0 : i32
    return %arg1, %arg0 : i32, i32
  }
}

</mosaic_0001>

<llo_original>
// kernel: tpu_custom_call.1
$region0: #{tpu_custom_call.1}
  #allocation0 [shape = 'u32[]', space=smem, size = 0x4, offset = 0x4, fixed_abs, tag = 'smem constant byte address 0x4 - core index']
  #allocation1 [shape = 'u32[144,128]{1,0:T(1,128)}', space=vmem, size = 0x12000, scoped, tag = 'internal scratch']
  %s0 = inlined_call_operand.hbm [shape: f32[8,128], index: 0, kind: input, shape index: {}]
  %s1 = inlined_call_operand.hbm [shape: f32[1,128,128], index: 1, kind: input, shape index: {}]
  %s2 = inlined_call_operand.vmem [shape: f32[1,1,128], index: 2, kind: input, shape index: {}]
  %s3 = inlined_call_operand.hbm [shape: f32[8,128], index: 3, kind: output, shape index: {}]
  %s4 = sld [smem:[#allocation0]]
  $region30: #{tpu_custom_call.1} parent=0
    _
  %s6 = ssub.s32 1, %s4
  %s7 = scalar_select 0, %s6, %s4
  $region1: #{tpu_custom_call.1} parent=0
    #allocation2 [shape = 'u8[4096]{0}', space=vmem, size = 0x1000, scoped, tag = 'input window, operand 0, single buffered']
    #allocation3 [shape = 's32[1]{0}', space=sflag, size = 0x4, scoped, tag = 'scoped memory for tpu_custom_call.1']
    #allocation4 [shape = 's32[1]{0}', space=sflag, size = 0x4, scoped, tag = 'scoped memory for tpu_custom_call.1']
    #allocation5 [shape = 'u8[65536]{0}', space=vmem, size = 0x10000, scoped, tag = 'input window, operand 1, single buffered']
    #allocation6 [shape = 's32[1]{0}', space=sflag, size = 0x4, scoped, tag = 'scoped memory for tpu_custom_call.1']
    #allocation7 [shape = 'u8[4096]{0}', space=vmem, size = 0x1000, scoped, tag = 'output window, operand 0, single buffered']
    %8 = vsyncpa [#allocation3], 0
    %9 = vsyncpa [#allocation6], 0
    %10 = vsyncpa [#allocation4], 0
    // Predicated region
    $region2: #{tpu_custom_call.1} parent=1 // pred_check
      _
    $region3: #{tpu_custom_call.1} parent=1 // pred_check_branch
      %12 = sbr.rel (0) target = $region5
    $region4: #{tpu_custom_call.1} parent=1 // pred_region
      %s14 = ssub.s32 128, 128
      %15 = vsyncadd [#allocation3], %s14
      %s17 = sshll.u32 [#allocation2], 4
      %s18 = int_to_ptr.vmem [resolvable:$true] %s17
      %20 = dma.hbm_to_vmem [thread:$0]  %s0, 128, %s18, [#allocation3]
    $region5: #{tpu_custom_call.1} parent=1 // pred_fallthru
      _
    // Predicated region
    $region6: #{tpu_custom_call.1} parent=1 // pred_check
      _
    $region7: #{tpu_custom_call.1} parent=1 // pred_check_branch
      %22 = sbr.rel (0) target = $region9
    $region8: #{tpu_custom_call.1} parent=1 // pred_region
      %s24 = ssub.s32 2048, 2048
      %25 = vsyncadd [#allocation6], %s24
      %s26 = sshll.u32 [#allocation5], 4
      %s27 = int_to_ptr.vmem [resolvable:$true] %s26
      %32 = dma.hbm_to_vmem [thread:$0]  %s1, 2048, %s27, [#allocation6], 128, 128, 8
    $region9: #{tpu_custom_call.1} parent=1 // pred_fallthru
      _
    // Predicated region
    $region10: #{tpu_custom_call.1} parent=1 // pred_check
      _
    $region11: #{tpu_custom_call.1} parent=1 // pred_check_branch
      %34 = sbr.rel (0) target = $region13
    $region12: #{tpu_custom_call.1} parent=1 // pred_region
      _
    $region13: #{tpu_custom_call.1} parent=1 // pred_fallthru
      _
    // Predicated region
    $region14: #{tpu_custom_call.1} parent=1 // pred_check
      _
    $region15: #{tpu_custom_call.1} parent=1 // pred_check_branch
      %36 = sbr.rel (0) target = $region17
    $region16: #{tpu_custom_call.1} parent=1 // pred_region
      %37 = dma.done [#allocation3], 128
    $region17: #{tpu_custom_call.1} parent=1 // pred_fallthru
      _
    // Predicated region
    $region18: #{tpu_custom_call.1} parent=1 // pred_check
      _
    $region19: #{tpu_custom_call.1} parent=1 // pred_check_branch
      %39 = sbr.rel (0) target = $region21
    $region20: #{tpu_custom_call.1} parent=1 // pred_region
      %40 = dma.done [#allocation6], 2048
    $region21: #{tpu_custom_call.1} parent=1 // pred_fallthru
      _
    %v41 = vld [vmem:[#allocation2] sm:$0xff]
    %v42 = vld [vmem:[#allocation5] sm:$0xff]
    %v43 = vld [vmem:[#allocation5 + $0x8] sm:$0xff]
    %v44 = vld [vmem:[#allocation5 + $0x10] sm:$0xff]
    %v45 = vld [vmem:[#allocation5 + $0x18] sm:$0xff]
    %v46 = vld [vmem:[#allocation5 + $0x20] sm:$0xff]
    %v47 = vld [vmem:[#allocation5 + $0x28] sm:$0xff]
    %v48 = vld [vmem:[#allocation5 + $0x30] sm:$0xff]
    %v49 = vld [vmem:[#allocation5 + $0x38] sm:$0xff]
    %v50 = vld [vmem:[#allocation5 + $0x40] sm:$0xff]
    %v51 = vld [vmem:[#allocation5 + $0x48] sm:$0xff]
    %v52 = vld [vmem:[#allocation5 + $0x50] sm:$0xff]
    %v53 = vld [vmem:[#allocation5 + $0x58] sm:$0xff]
    %v54 = vld [vmem:[#allocation5 + $0x60] sm:$0xff]
    %v55 = vld [vmem:[#allocation5 + $0x68] sm:$0xff]
    %v56 = vld [vmem:[#allocation5 + $0x70] sm:$0xff]
    %v57 = vld [vmem:[#allocation5 + $0x78] sm:$0xff]
    %v58 = vld [vmem:[%s2] sm:$0x1]
    %v60 = vlaneseq
    %v61 = vshrl.u32 %v60, 7
    %v62 = vsub.s32 0, %v61
    %v63 = vrot.slane %v58, %v62
    %65 = vmatprep.subr.mxu0 0.0
    %66 = vmatpush1.msra.mxu0 %v42
    %67 = vmatprep.subr.mxu0 0.0
    %68 = vmatpush1.msra.mxu0 %v43
    %69 = vmatprep.subr.mxu0 0.0
    %70 = vmatpush1.msra.mxu0 %v44
    %71 = vmatprep.subr.mxu0 0.0
    %72 = vmatpush1.msra.mxu0 %v45
    %73 = vmatprep.subr.mxu0 0.0
    %74 = vmatpush1.msra.mxu0 %v46
    %75 = vmatprep.subr.mxu0 0.0
    %76 = vmatpush1.msra.mxu0 %v47
    %77 = vmatprep.subr.mxu0 0.0
    %78 = vmatpush1.msra.mxu0 %v48
    %79 = vmatprep.subr.mxu0 0.0
    %80 = vmatpush1.msra.mxu0 %v49
    %81 = vmatprep.subr.mxu0 0.0
    %82 = vmatpush1.msra.mxu0 %v50
    %83 = vmatprep.subr.mxu0 0.0
    %84 = vmatpush1.msra.mxu0 %v51
    %85 = vmatprep.subr.mxu0 0.0
    %86 = vmatpush1.msra.mxu0 %v52
    %87 = vmatprep.subr.mxu0 0.0
    %88 = vmatpush1.msra.mxu0 %v53
    %89 = vmatprep.subr.mxu0 0.0
    %90 = vmatpush1.msra.mxu0 %v54
    %91 = vmatprep.subr.mxu0 0.0
    %92 = vmatpush1.msra.mxu0 %v55
    %93 = vmatprep.subr.mxu0 0.0
    %94 = vmatpush1.msra.mxu0 %v56
    %95 = vmatprep.subr.mxu0 0.0
    %96 = vmatpush1.msra.mxu0 %v57
    %97 = vmatprep.subr.mxu0 0.0
    %98 = vmatpush1.msra.mxu0 0.0
    %99 = vmatprep.subr.mxu0 0.0
    %100 = vmatpush1.msra.mxu0 0.0
    %101 = vmatprep.subr.mxu0 0.0
    %102 = vmatpush1.msra.mxu0 0.0
    %103 = vmatprep.subr.mxu0 0.0
    %104 = vmatpush1.msra.mxu0 0.0
    %105 = vmatprep.subr.mxu0 0.0
    %106 = vmatpush1.msra.mxu0 0.0
    %107 = vmatprep.subr.mxu0 0.0
    %108 = vmatpush1.msra.mxu0 0.0
    %109 = vmatprep.subr.mxu0 0.0
    %110 = vmatpush1.msra.mxu0 0.0
    %111 = vmatprep.subr.mxu0 0.0
    %112 = vmatpush1.msra.mxu0 0.0
    %113 = vmatprep.subr.mxu0 0.0
    %114 = vmatpush1.msra.mxu0 0.0
    %115 = vmatprep.subr.mxu0 0.0
    %116 = vmatpush1.msra.mxu0 0.0
    %117 = vmatprep.subr.mxu0 0.0
    %118 = vmatpush1.msra.mxu0 0.0
    %119 = vmatprep.subr.mxu0 0.0
    %120 = vmatpush1.msra.mxu0 0.0
    %121 = vmatprep.subr.mxu0 0.0
    %122 = vmatpush1.msra.mxu0 0.0
    %123 = vmatprep.subr.mxu0 0.0
    %124 = vmatpush1.msra.mxu0 0.0
    %125 = vmatprep.subr.mxu0 0.0
    %126 = vmatpush1.msra.mxu0 0.0
    %127 = vmatprep.subr.mxu0 0.0
    %128 = vmatpush1.msra.mxu0 0.0
    %129 = vmatprep.mubr.f32.mxu0 0.0
    %130 = vmatmul.mubr.f32.gmra.mrb[0].mxu0 %v41
    %v131 = vpop.f32.mrb[0].mxu0
    %v132 = vadd.f32 %v63, %v131
    %v133 = vpop.f32.mrb[0].mxu0
    %134 = vdwg.mxu0
    %135 = vst [vmem:[#allocation7] sm:$0xff] %v132
    // Predicated region
    $region22: #{tpu_custom_call.1} parent=1 // pred_check
      _
    $region23: #{tpu_custom_call.1} parent=1 // pred_check_branch
      %137 = sbr.rel (0) target = $region25
    $region24: #{tpu_custom_call.1} parent=1 // pred_region
      %s139 = ssub.s32 128, 128
      %140 = vsyncadd [#allocation4], %s139
      %s142 = sshll.u32 [#allocation7], 4
      %s143 = int_to_ptr.vmem [resolvable:$true] %s142
      %145 = dma.vmem_to_hbm [thread:$0]  %s143, 128, %s3, [#allocation4]
    $region25: #{tpu_custom_call.1} parent=1 // pred_fallthru
      _
    // Predicated region
    $region26: #{tpu_custom_call.1} parent=1 // pred_check
      _
    $region27: #{tpu_custom_call.1} parent=1 // pred_check_branch
      %147 = sbr.rel (0) target = $region29
    $region28: #{tpu_custom_call.1} parent=1 // pred_region
      %148 = dma.done [#allocation4], 128
    $region29: #{tpu_custom_call.1} parent=1 // pred_fallthru
      _
    %149 = vsyncpa [#allocation3], 1
    %150 = vsyncpa [#allocation6], 1
    %151 = vsyncpa [#allocation4], 1

</llo_original>
